<compile_context>
chip_gen: v7x
topology: tpu7x:2x2x1
jax: 0.10.0
libtpu: 0.0.40
codegen_flags: <defaults>
</compile_context>

<pallas_src>
import functools

import jax
import jax.numpy as jnp
from jax.experimental import pallas as pl
from jax.experimental.pallas import tpu as pltpu

EPS = 1e-8


def _round_up(n, m):
    return ((n + m - 1) // m) * m


def _vmem_budget_bytes():
    """~85% of physical VMEM (leaves headroom for Mosaic internal scratch)."""
    try:
        cap = int(pltpu.get_tpu_info().vmem_capacity_bytes)
    except Exception:
        cap = 64 * 1024 * 1024  # conservative fallback: v7x physical per core
    return int(cap * 0.85)


def _default_tm():
    """Per-generation starting row tile (v5e is memory-bound; 256 is plenty)."""
    try:
        kind = jax.devices()[0].device_kind.lower()
    except Exception:
        kind = ""
    if "v5 lite" in kind or "v5e" in kind or "v5litepod" in kind:
        return 256
    return 512


def _kernel_resident(x_ref, w_ref, b_ref, o_ref, *, d_model):
    """Grid over M only; W (scale-folded, bf16) is VMEM-resident."""
    # RMSNorm over the true d_model (padded columns, if any, are zero).
    x32 = x_ref[...].astype(jnp.float32)
    sumsq = jnp.sum(x32 * x32, axis=-1, keepdims=True)             # (tm, 1)
    rms = jnp.sqrt(sumsq * (1.0 / d_model))
    inv = pl.reciprocal(rms + EPS, approx=True)                     # EUP slot
    y = (x32 * inv).astype(jnp.bfloat16)                            # MXU operand
    # RMSNorm scale is already folded into W on the wrapper side.
    z = jnp.dot(y, w_ref[...], preferred_element_type=jnp.float32)
    z = z + b_ref[...]                                              # (1, Dp) f32 bias
    # Residual re-reads x_ref so the f32 tile copy is not live across the dot.
    o_ref[...] = (x_ref[...].astype(jnp.float32) + z).astype(o_ref.dtype)


def _kernel_streamed(x_ref, w_ref, b_ref, o_ref, inv_ref, *, d_model, tn):
    """Grid (M tiles, N tiles); W column blocks streamed; 1/rms cached per M tile."""
    n = pl.program_id(1)

    @pl.when(n == 0)
    def _():
        x32 = x_ref[...].astype(jnp.float32)
        sumsq = jnp.sum(x32 * x32, axis=-1, keepdims=True)
        rms = jnp.sqrt(sumsq * (1.0 / d_model))
        inv_ref[...] = pl.reciprocal(rms + EPS, approx=True)

    y = (x_ref[...].astype(jnp.float32) * inv_ref[...]).astype(jnp.bfloat16)
    z = jnp.dot(y, w_ref[...], preferred_element_type=jnp.float32)
    z = z + b_ref[...]
    col = pl.multiple_of(n * tn, tn)
    x_col = x_ref[:, pl.ds(col, tn)].astype(jnp.float32)
    o_ref[...] = (x_col + z).astype(o_ref.dtype)


def prenorm_and_add(x, scale, w, b):
    """x: (B, S, D); scale: (D,); w: (D, D) [in, out]; b: (D,)."""
    B, S, D = x.shape
    M = B * S
    itemsize = jnp.dtype(x.dtype).itemsize
    budget = _vmem_budget_bytes()

    # Fold RMSNorm scale into the sublayer weight: (scale*x_n) @ W == x_n @ (diag(scale) @ W).
    w_folded = (scale.astype(jnp.float32)[:, None] * w.astype(jnp.float32)).astype(jnp.bfloat16)

    lane_dense = (D % 128 == 0)
    if lane_dense:
        # Fast path: no wrapper-side pad / slice copies of the activations.
        Dp = D
        x2 = x.reshape(M, D)                         # metadata-only reshape
        w2 = w_folded
        b2 = b.astype(jnp.float32).reshape(1, D)
    else:
        # Lane-dense padding of the feature axis only (M tail handled by grid masking).
        # TODO(synk): for very large D not divisible by 128 this still keeps W resident;
        # combine padding with the streamed-W path if that case ever matters.
        Dp = _round_up(D, 128)
        x2 = jnp.zeros((M, Dp), x.dtype).at[:, :D].set(x.reshape(M, D))
        w2 = jnp.zeros((Dp, Dp), jnp.bfloat16).at[:D, :D].set(w_folded)
        b2 = jnp.zeros((1, Dp), jnp.float32).at[0, :D].set(b.astype(jnp.float32))

    w_bytes = Dp * Dp * 2  # bf16 W, single-buffered when resident

    # Stream W (N-tiled) when a resident copy would eat too much of the budget.
    use_streamed = lane_dense and (w_bytes > budget // 3)

    if not use_streamed:
        # ---------------- resident-W kernel: grid over M only ----------------
        tm = _default_tm()
        while tm > 8:
            need = (4 * tm * Dp * itemsize          # 2 x-buffers + 2 out-buffers
                    + 3 * tm * Dp * 4               # y / z / f32-cast temporaries
                    + w_bytes + Dp * 4)             # resident W + bias
            if need + (2 << 20) <= budget:
                break
            tm //= 2
        tm = max(8, min(tm, _round_up(M, 8)))
        need = 4 * tm * Dp * itemsize + 3 * tm * Dp * 4 + w_bytes + Dp * 4
        vmem_limit = min(budget, max(int(need * 1.25) + (2 << 20), 32 << 20))

        kernel = functools.partial(_kernel_resident, d_model=D)
        out2 = pl.pallas_call(
            kernel,
            out_shape=jax.ShapeDtypeStruct((M, Dp), x.dtype),
            grid_spec=pltpu.PrefetchScalarGridSpec(
                num_scalar_prefetch=0,
                grid=(pl.cdiv(M, tm),),
                in_specs=[
                    # Streaming x tiles: default double-buffering; tail block masked.
                    pl.BlockSpec((tm, Dp), lambda i: (i, 0)),
                    # Grid-invariant operands: single-buffered, never re-DMAed.
                    pl.BlockSpec((Dp, Dp), lambda i: (0, 0), pipeline_mode=pl.Buffered(1)),
                    pl.BlockSpec((1, Dp), lambda i: (0, 0), pipeline_mode=pl.Buffered(1)),
                ],
                out_specs=pl.BlockSpec((tm, Dp), lambda i: (i, 0)),
            ),
            compiler_params=pltpu.CompilerParams(
                dimension_semantics=("parallel",),
                vmem_limit_bytes=vmem_limit,
            ),
        )(x2, w2, b2)
    else:
        # ------------- streamed-W kernel: grid over (M tiles, N tiles) -------------
        tn = 128
        for cand in (1024, 512, 256, 128):
            if Dp % cand == 0:
                tn = cand
                break
        tm = _default_tm()
        while tm > 8:
            need = (2 * tm * Dp * itemsize              # x double buffer (full rows)
                    + 2 * Dp * tn * 2                   # W column blocks, double-buffered
                    + 2 * tm * tn * itemsize            # out double buffer
                    + tm * Dp * 2 + 2 * tm * tn * 4     # y bf16 + z temporaries
                    + 2 * tn * 4 + tm * 4)              # bias blocks + inv scratch
            if need + (2 << 20) <= budget:
                break
            tm //= 2
        tm = max(8, min(tm, _round_up(M, 8)))
        need = (2 * tm * Dp * itemsize + 2 * Dp * tn * 2 + 2 * tm * tn * itemsize
                + tm * Dp * 2 + 2 * tm * tn * 4 + 2 * tn * 4 + tm * 4)
        vmem_limit = min(budget, max(int(need * 1.25) + (2 << 20), 32 << 20))

        kernel = functools.partial(_kernel_streamed, d_model=D, tn=tn)
        out2 = pl.pallas_call(
            kernel,
            out_shape=jax.ShapeDtypeStruct((M, Dp), x.dtype),
            grid_spec=pltpu.PrefetchScalarGridSpec(
                num_scalar_prefetch=0,
                grid=(pl.cdiv(M, tm), Dp // tn),
                in_specs=[
                    # Full-row x tile, constant in n -> fetched once per M tile.
                    pl.BlockSpec((tm, Dp), lambda i, n: (i, 0)),
                    pl.BlockSpec((Dp, tn), lambda i, n: (0, n)),
                    pl.BlockSpec((1, tn), lambda i, n: (0, n)),
                ],
                out_specs=pl.BlockSpec((tm, tn), lambda i, n: (i, n)),
                scratch_shapes=[pltpu.VMEM((tm, 1), jnp.float32)],
            ),
            compiler_params=pltpu.CompilerParams(
                dimension_semantics=("parallel", "arbitrary"),
                vmem_limit_bytes=vmem_limit,
            ),
        )(x2, w2, b2)

    if not lane_dense:
        out2 = out2[:, :D]
    return out2.reshape(B, S, D)


def reference(x, scale, w, b):
    """Pure-JAX fp32 reference of X + Linear(RMSNorm(X))."""
    xf = x.astype(jnp.float32)
    d = xf.shape[-1]
    rms = jnp.sqrt(jnp.sum(xf * xf, axis=-1, keepdims=True) / d)
    y = scale * (xf / (rms + EPS))
    z = y @ w + b
    return (xf + z).astype(x.dtype)


if __name__ == "__main__":
    B, S, D = 2, 8, 32
    key = jax.random.PRNGKey(0)
    kx, kw, kb, ks = jax.random.split(key, 4)

    x = jax.random.normal(kx, (B, S, D), dtype=jnp.float32)
    # RMSNorm scale (init ones in the module; perturb to exercise the scale fold).
    scale = 1.0 + 0.1 * jax.random.normal(ks, (D,), dtype=jnp.float32)
    # Deterministic sublayer (Linear d_model -> d_model) params.
    w = jax.random.normal(kw, (D, D), dtype=jnp.float32) * (1.0 / jnp.sqrt(D))
    b = jax.random.normal(kb, (D,), dtype=jnp.float32) * 0.01

    out = prenorm_and_add(x, scale, w, b)
    out = jax.block_until_ready(out)

    ref = reference(x, scale, w, b)
    assert out.shape == (B, S, D)
    # bf16 MXU operands + approx reciprocal => slightly looser tolerance than pure fp32.
    err = float(jnp.max(jnp.abs(out - ref)))
    assert jnp.allclose(out, ref, atol=5e-2, rtol=5e-2), f"max abs err {err}"

    print("KERNEL_OK")
</pallas_src>

<mosaic_0001>
module attributes {stable_mosaic.version = 11 : i64} {
  func.func @_kernel_resident(%arg0: i32, %arg1: memref<16x128xf32, #tpu.memory_space<vmem>>, %arg2: memref<128x128xbf16, #tpu.memory_space<vmem>>, %arg3: memref<1x128xf32, #tpu.memory_space<vmem>>, %arg4: memref<16x128xf32, #tpu.memory_space<vmem>>) attributes {dimension_semantics = [#tpu.dimension_semantics<parallel>], iteration_bounds = array<i64: 1>, scalar_prefetch = 0 : i64, scratch_operands = 0 : i64, tpu.core_type = #tpu.core_type<tc>, window_params = [{transform_indices = @transform_0, window_bounds = array<i64: 16, 128>}, {pipeline_mode = #tpu.pipeline_mode<synchronous>, transform_indices = @transform_1, window_bounds = array<i64: 128, 128>}, {pipeline_mode = #tpu.pipeline_mode<synchronous>, transform_indices = @transform_2, window_bounds = array<i64: 1, 128>}, {transform_indices = @transform_3, window_bounds = array<i64: 16, 128>}]} {
    %c0 = arith.constant 0 : index
    %c0_0 = arith.constant 0 : index
    %0 = vector.load %arg1[%c0, %c0_0] : memref<16x128xf32, #tpu.memory_space<vmem>>, vector<16x128xf32>
    %1 = arith.mulf %0, %0 : vector<16x128xf32>
    %cst = arith.constant dense<0.000000e+00> : vector<16xf32>
    %2 = vector.multi_reduction <add>, %1, %cst [1] : vector<16x128xf32> to vector<16xf32>
    %3 = vector.shape_cast %2 : vector<16xf32> to vector<16x1xf32>
    %cst_1 = arith.constant 3.125000e-02 : f32
    %4 = vector.broadcast %cst_1 : f32 to vector<16x1xf32>
    %5 = arith.mulf %3, %4 : vector<16x1xf32>
    %6 = math.sqrt %5 : vector<16x1xf32>
    %cst_2 = arith.constant 9.99999993E-9 : f32
    %7 = vector.broadcast %cst_2 : f32 to vector<16x1xf32>
    %8 = arith.addf %6, %7 : vector<16x1xf32>
    %9 = tpu.reciprocal %8 {approx = true} : vector<16x1xf32> -> vector<16x1xf32>
    %10 = vector.broadcast %9 : vector<16x1xf32> to vector<16x128xf32>
    %11 = arith.mulf %0, %10 : vector<16x128xf32>
    %12 = arith.truncf %11 : vector<16x128xf32> to vector<16x128xbf16>
    %c0_3 = arith.constant 0 : index
    %c0_4 = arith.constant 0 : index
    %13 = vector.load %arg2[%c0_3, %c0_4] : memref<128x128xbf16, #tpu.memory_space<vmem>>, vector<128x128xbf16>
    %cst_5 = arith.constant dense<0.000000e+00> : vector<16x128xf32>
    %14 = tpu.matmul %12, %13, %cst_5 {dimension_numbers = #tpu.dot_dimension_numbers<[1], [0], [0], [1], [0, 0, 1, 1], [], []>} : vector<16x128xbf16>, vector<128x128xbf16>, vector<16x128xf32> -> vector<16x128xf32>
    %c0_6 = arith.constant 0 : index
    %c0_7 = arith.constant 0 : index
    %15 = vector.load %arg3[%c0_6, %c0_7] : memref<1x128xf32, #tpu.memory_space<vmem>>, vector<1x128xf32>
    %16 = vector.broadcast %15 : vector<1x128xf32> to vector<16x128xf32>
    %17 = arith.addf %14, %16 : vector<16x128xf32>
    %c0_8 = arith.constant 0 : index
    %c0_9 = arith.constant 0 : index
    %18 = vector.load %arg1[%c0_8, %c0_9] : memref<16x128xf32, #tpu.memory_space<vmem>>, vector<16x128xf32>
    %19 = arith.addf %18, %17 : vector<16x128xf32>
    %c0_10 = arith.constant 0 : index
    %c0_11 = arith.constant 0 : index
    %20 = vector.load %arg4[%c0_10, %c0_11] : memref<16x128xf32, #tpu.memory_space<vmem>>, vector<16x128xf32>
    tpu.vector_store %arg4[%c0_10, %c0_11], %19 {strides = array<i32>} : memref<16x128xf32, #tpu.memory_space<vmem>>, vector<16x128xf32>,
    return
  }
  func.func @transform_0(%arg0: i32) -> (i32, i32) {
    %c0_i32 = arith.constant 0 : i32
    %c0_i32_0 = arith.constant 0 : i32
    return %arg0, %c0_i32 : i32, i32
  }
  func.func @transform_1(%arg0: i32) -> (i32, i32) {
    %c0_i32 = arith.constant 0 : i32
    %c0_i32_0 = arith.constant 0 : i32
    %c0_i32_1 = arith.constant 0 : i32
    return %c0_i32, %c0_i32_0 : i32, i32
  }
  func.func @transform_2(%arg0: i32) -> (i32, i32) {
    %c0_i32 = arith.constant 0 : i32
    %c0_i32_0 = arith.constant 0 : i32
    %c0_i32_1 = arith.constant 0 : i32
    return %c0_i32, %c0_i32_0 : i32, i32
  }
  func.func @transform_3(%arg0: i32) -> (i32, i32) {
    %c0_i32 = arith.constant 0 : i32
    %c0_i32_0 = arith.constant 0 : i32
    return %arg0, %c0_i32 : i32, i32
  }
}

</mosaic_0001>

<llo_original>
// kernel: tpu_custom_call.1
$region0: #{tpu_custom_call.1}
  #allocation0 [shape = 'u32[]', space=smem, size = 0x4, offset = 0x4, fixed_abs, tag = 'smem constant byte address 0x4 - core index']
  #allocation1 [shape = 'u32[144,128]{1,0:T(1,128)}', space=vmem, size = 0x12000, scoped, tag = 'internal scratch']
  %s0 = inlined_call_operand.hbm [shape: f32[16,128], index: 0, kind: input, shape index: {}]
  %s1 = inlined_call_operand.hbm [shape: bf16[128,128], index: 1, kind: input, shape index: {}]
  %s2 = inlined_call_operand.vmem [shape: f32[1,128], index: 2, kind: input, shape index: {}]
  %s3 = inlined_call_operand.hbm [shape: f32[16,128], index: 3, kind: output, shape index: {}]
  %s4 = sld [smem:[#allocation0]]
  $region30: #{tpu_custom_call.1} parent=0
    _
  %s6 = ssub.s32 1, %s4
  %s7 = scalar_select 0, %s6, %s4
  $region1: #{tpu_custom_call.1} parent=0
    #allocation2 [shape = 'u8[8192]{0}', space=vmem, size = 0x2000, scoped, tag = 'input window, operand 0, single buffered']
    #allocation3 [shape = 's32[1]{0}', space=sflag, size = 0x4, scoped, tag = 'scoped memory for tpu_custom_call.1']
    #allocation4 [shape = 's32[1]{0}', space=sflag, size = 0x4, scoped, tag = 'scoped memory for tpu_custom_call.1']
    #allocation5 [shape = 'u8[32768]{0}', space=vmem, size = 0x8000, scoped, tag = 'input window, operand 1, single buffered']
    #allocation6 [shape = 's32[1]{0}', space=sflag, size = 0x4, scoped, tag = 'scoped memory for tpu_custom_call.1']
    #allocation7 [shape = 'u8[8192]{0}', space=vmem, size = 0x2000, scoped, tag = 'output window, operand 0, single buffered']
    %8 = vsyncpa [#allocation3], 0
    %9 = vsyncpa [#allocation6], 0
    %10 = vsyncpa [#allocation4], 0
    // Predicated region
    $region2: #{tpu_custom_call.1} parent=1 // pred_check
      _
    $region3: #{tpu_custom_call.1} parent=1 // pred_check_branch
      %12 = sbr.rel (0) target = $region5
    $region4: #{tpu_custom_call.1} parent=1 // pred_region
      %s14 = ssub.s32 256, 256
      %15 = vsyncadd [#allocation3], %s14
      %s16 = sshll.u32 [#allocation2], 4
      %s17 = int_to_ptr.vmem [resolvable:$true] %s16
      %22 = dma.hbm_to_vmem [thread:$0]  %s0, 256, %s17, [#allocation3], 128, 128, 8
    $region5: #{tpu_custom_call.1} parent=1 // pred_fallthru
      _
    // Predicated region
    $region6: #{tpu_custom_call.1} parent=1 // pred_check
      _
    $region7: #{tpu_custom_call.1} parent=1 // pred_check_branch
      %24 = sbr.rel (0) target = $region9
    $region8: #{tpu_custom_call.1} parent=1 // pred_region
      %s26 = ssub.s32 1024, 1024
      %27 = vsyncadd [#allocation6], %s26
      %s28 = sshll.u32 [#allocation5], 4
      %s29 = int_to_ptr.vmem [resolvable:$true] %s28
      %34 = dma.hbm_to_vmem [thread:$0]  %s1, 1024, %s29, [#allocation6], 64, 64, 4
    $region9: #{tpu_custom_call.1} parent=1 // pred_fallthru
      _
    // Predicated region
    $region10: #{tpu_custom_call.1} parent=1 // pred_check
      _
    $region11: #{tpu_custom_call.1} parent=1 // pred_check_branch
      %36 = sbr.rel (0) target = $region13
    $region12: #{tpu_custom_call.1} parent=1 // pred_region
      _
    $region13: #{tpu_custom_call.1} parent=1 // pred_fallthru
      _
    // Predicated region
    $region14: #{tpu_custom_call.1} parent=1 // pred_check
      _
    $region15: #{tpu_custom_call.1} parent=1 // pred_check_branch
      %38 = sbr.rel (0) target = $region17
    $region16: #{tpu_custom_call.1} parent=1 // pred_region
      %39 = dma.done [#allocation3], 256
    $region17: #{tpu_custom_call.1} parent=1 // pred_fallthru
      _
    // Predicated region
    $region18: #{tpu_custom_call.1} parent=1 // pred_check
      _
    $region19: #{tpu_custom_call.1} parent=1 // pred_check_branch
      %41 = sbr.rel (0) target = $region21
    $region20: #{tpu_custom_call.1} parent=1 // pred_region
      %42 = dma.done [#allocation6], 1024
    $region21: #{tpu_custom_call.1} parent=1 // pred_fallthru
      _
    %v44 = vld [vmem:[#allocation2] sm:$0xff]
    %v45 = vld [vmem:[#allocation2 + $0x8] sm:$0xff]
    %v46 = vmul.f32 %v44, %v44
    %v47 = vmul.f32 %v45, %v45
    %48 = vadd.xlane.f32.xlu0 %v46
    %v49 = vpop.xlane.xlu0 %48
    %50 = vadd.xlane.f32.xlu0 %v47
    %v51 = vpop.xlane.xlu0 %50
    %v52 = vmul.f32 %v49, 0.03125
    %v53 = vmul.f32 %v51, 0.03125
    %v54 = vrsqrt.pop %v52
    %v55 = vmul.f32 %v52, %v54
    %vm56 = vcmp.eq.f32.partialorder %v52, inf
    %v57 = vsel %vm56, %v52, %v55
    %vm58 = vcmp.eq.f32.partialorder %v52, 0.0
    %v59 = vand.u32 %v52, 2147483648
    %v60 = vsel %vm58, %v59, %v57
    %v61 = vrsqrt.pop %v53
    %v62 = vmul.f32 %v53, %v61
    %vm63 = vcmp.eq.f32.partialorder %v53, inf
    %v64 = vsel %vm63, %v53, %v62
    %vm65 = vcmp.eq.f32.partialorder %v53, 0.0
    %v66 = vand.u32 %v53, 2147483648
    %v67 = vsel %vm65, %v66, %v64
    %v68 = vadd.f32 %v60, 1e-08
    %v69 = vadd.f32 %v67, 1e-08
    %v70 = vrcp.pop %v68
    %v71 = vrcp.pop %v69
    %v72 = vmul.f32 %v44, %v70
    %v73 = vmul.f32 %v45, %v71
    %v74 = vpack.c.bf16 %v73, %v72
    %v75 = vld [vmem:[#allocation5] sm:$0xf]
    %v76 = vld [vmem:[#allocation5 + $0x4] sm:$0xf]
    %v77 = vld [vmem:[#allocation5 + $0x8] sm:$0xf]
    %v78 = vld [vmem:[#allocation5 + $0xc] sm:$0xf]
    %v79 = vld [vmem:[#allocation5 + $0x10] sm:$0xf]
    %v80 = vld [vmem:[#allocation5 + $0x14] sm:$0xf]
    %v81 = vld [vmem:[#allocation5 + $0x18] sm:$0xf]
    %v82 = vld [vmem:[#allocation5 + $0x1c] sm:$0xf]
    %v83 = vld [vmem:[#allocation5 + $0x20] sm:$0xf]
    %v84 = vld [vmem:[#allocation5 + $0x24] sm:$0xf]
    %v85 = vld [vmem:[#allocation5 + $0x28] sm:$0xf]
    %v86 = vld [vmem:[#allocation5 + $0x2c] sm:$0xf]
    %v87 = vld [vmem:[#allocation5 + $0x30] sm:$0xf]
    %v88 = vld [vmem:[#allocation5 + $0x34] sm:$0xf]
    %v89 = vld [vmem:[#allocation5 + $0x38] sm:$0xf]
    %v90 = vld [vmem:[#allocation5 + $0x3c] sm:$0xf]
    %v91 = vld [vmem:[%s2] sm:$0x1]
    %v93 = vlaneseq
    %v94 = vshrl.u32 %v93, 7
    %v95 = vsub.s32 0, %v94
    %v96 = vrot.slane %v91, %v95
    %v114 = vunpack.c.l.b16 %v75
    %v115 = vunpack.c.l.b16 %v76
    %v116 = vunpack.c.l.b16 %v77
    %v117 = vunpack.c.l.b16 %v78
    %v118 = vunpack.c.l.b16 %v79
    %v119 = vunpack.c.l.b16 %v80
    %v120 = vunpack.c.l.b16 %v81
    %v121 = vunpack.c.l.b16 %v82
    %v122 = vunpack.c.l.b16 %v83
    %v123 = vunpack.c.l.b16 %v84
    %v124 = vunpack.c.l.b16 %v85
    %v125 = vunpack.c.l.b16 %v86
    %v126 = vunpack.c.l.b16 %v87
    %v127 = vunpack.c.l.b16 %v88
    %v128 = vunpack.c.l.b16 %v89
    %v129 = vunpack.c.l.b16 %v90
    %v130 = vpack.c.b16 %v115, %v114
    %v131 = vpack.c.b16 %v117, %v116
    %v132 = vpack.c.b16 %v119, %v118
    %v133 = vpack.c.b16 %v121, %v120
    %v134 = vpack.c.b16 %v123, %v122
    %v135 = vpack.c.b16 %v125, %v124
    %v136 = vpack.c.b16 %v127, %v126
    %v137 = vpack.c.b16 %v129, %v128
    %146 = vmatprep.subr.bf16.mxu0 0
    %147 = vmatpush1.bf16.msra.mxu0 %v130
    %148 = vmatprep.subr.bf16.mxu0 0
    %149 = vmatpush1.bf16.msra.mxu0 %v131
    %150 = vmatprep.subr.bf16.mxu0 0
    %151 = vmatpush1.bf16.msra.mxu0 %v132
    %152 = vmatprep.subr.bf16.mxu0 0
    %153 = vmatpush1.bf16.msra.mxu0 %v133
    %154 = vmatprep.subr.bf16.mxu0 0
    %155 = vmatpush1.bf16.msra.mxu0 %v134
    %156 = vmatprep.subr.bf16.mxu0 0
    %157 = vmatpush1.bf16.msra.mxu0 %v135
    %158 = vmatprep.subr.bf16.mxu0 0
    %159 = vmatpush1.bf16.msra.mxu0 %v136
    %160 = vmatprep.subr.bf16.mxu0 0
    %161 = vmatpush1.bf16.msra.mxu0 %v137
    %162 = vmatprep.subr.bf16.mxu0 0
    %163 = vmatpush1.bf16.msra.mxu0 0
    %164 = vmatprep.subr.bf16.mxu0 0
    %165 = vmatpush1.bf16.msra.mxu0 0
    %166 = vmatprep.subr.bf16.mxu0 0
    %167 = vmatpush1.bf16.msra.mxu0 0
    %168 = vmatprep.subr.bf16.mxu0 0
    %169 = vmatpush1.bf16.msra.mxu0 0
    %170 = vmatprep.subr.bf16.mxu0 0
    %171 = vmatpush1.bf16.msra.mxu0 0
    %172 = vmatprep.subr.bf16.mxu0 0
    %173 = vmatpush1.bf16.msra.mxu0 0
    %174 = vmatprep.subr.bf16.mxu0 0
    %175 = vmatpush1.bf16.msra.mxu0 0
    %176 = vmatprep.subr.bf16.mxu0 0
    %177 = vmatpush1.bf16.msra.mxu0 0
    %178 = vmatprep.mubr.bf16.mxu0 0
    %179 = vmatmul.mubr.bf16.gmra.mrb[0].mxu0 %v74
    %v180 = vpop.f32.mrb[0].mxu0
    %v181 = vadd.f32 %v96, %v180
    %v182 = vpop.f32.mrb[0].mxu0
    %v183 = vpop.f32.mrb[0].mxu0
    %v184 = vadd.f32 %v96, %v183
    %v185 = vpop.f32.mrb[0].mxu0
    %186 = vdwg.mxu0
    %v187 = vadd.f32 %v44, %v181
    %v188 = vadd.f32 %v45, %v184
    %189 = vst [vmem:[#allocation7] sm:$0xff] %v187
    %190 = vst [vmem:[#allocation7 + $0x8] sm:$0xff] %v188
    // Predicated region
    $region22: #{tpu_custom_call.1} parent=1 // pred_check
      _
    $region23: #{tpu_custom_call.1} parent=1 // pred_check_branch
      %192 = sbr.rel (0) target = $region25
    $region24: #{tpu_custom_call.1} parent=1 // pred_region
      %s194 = ssub.s32 256, 256
      %195 = vsyncadd [#allocation4], %s194
      %s196 = sshll.u32 [#allocation7], 4
      %s197 = int_to_ptr.vmem [resolvable:$true] %s196
      %202 = dma.vmem_to_hbm [thread:$0]  %s197, 256, %s3, [#allocation4], 128, 128, 8
    $region25: #{tpu_custom_call.1} parent=1 // pred_fallthru
      _
    // Predicated region
    $region26: #{tpu_custom_call.1} parent=1 // pred_check
      _
    $region27: #{tpu_custom_call.1} parent=1 // pred_check_branch
      %204 = sbr.rel (0) target = $region29
    $region28: #{tpu_custom_call.1} parent=1 // pred_region
      %205 = dma.done [#allocation4], 256
    $region29: #{tpu_custom_call.1} parent=1 // pred_fallthru
      _
    %206 = vsyncpa [#allocation3], 1
    %207 = vsyncpa [#allocation6], 1
    %208 = vsyncpa [#allocation4], 1

</llo_original>
